<compile_context>
chip_gen: v7x
topology: tpu7x:2x2x1
jax: 0.10.0
libtpu: 0.0.40
codegen_flags: <defaults>
</compile_context>

<pallas_src>
import jax
import jax.numpy as jnp
from jax.experimental import pallas as pl
from jax.experimental.pallas import tpu as pltpu

_LANES = 128
_SUBLANES = 8


def _make_regression_kernel(D, H1, H2, O):
    """Builds the kernel with static layer sizes and static SMEM offsets."""
    off_b1 = D * H1
    off_w2 = off_b1 + H1
    off_b2 = off_w2 + H1 * H2
    off_w3 = off_b2 + H2
    off_b3 = off_w3 + H2 * O

    def kernel(x_ref, p_ref, o_ref):
        # x_ref: (D, Sb, 128) VMEM, batch packed into sublanes+lanes
        # p_ref: flat (D*H1 + H1 + H1*H2 + H2 + H2*O + O,) f32 SMEM
        #        layout: W1 (row-major in,out) | b1 | W2 | b2 | W3 | b3
        # o_ref: (O, Sb, 128) VMEM, lane-dense output

        # ---- layer 1: h1[j] = relu(sum_k W1[k, j] * x[k] + b1[j]) ----
        h1 = []
        for j in range(H1):
            acc = p_ref[j] * x_ref[0] + p_ref[off_b1 + j]
            for k in range(1, D):
                acc = acc + p_ref[k * H1 + j] * x_ref[k]
            h1.append(jnp.maximum(acc, 0.0))

        # ---- layer 2: h2[j] = relu(sum_k W2[k, j] * h1[k] + b2[j]) ----
        h2 = []
        for j in range(H2):
            acc = p_ref[off_w2 + j] * h1[0] + p_ref[off_b2 + j]
            for k in range(1, H1):
                acc = acc + p_ref[off_w2 + k * H2 + j] * h1[k]
            h2.append(jnp.maximum(acc, 0.0))

        # ---- output layer: o[j] = sum_k W3[k, j] * h2[k] + b3[j] ----
        for j in range(O):
            acc = p_ref[off_w3 + j] * h2[0] + p_ref[off_b3 + j]
            for k in range(1, H2):
                acc = acc + p_ref[off_w3 + k * O + j] * h2[k]
            o_ref[j] = acc.astype(o_ref.dtype)

    return kernel


def regression_net_forward(x, params):
    """Pallas TPU forward for RegressionNet. x: (B, D) f32. Returns (B, O) f32."""
    w1, b1, w2, b2, w3, b3 = params
    B, D = x.shape
    H1 = w1.shape[1]
    H2 = w2.shape[1]
    O = w3.shape[1]

    blk_elems = _SUBLANES * _LANES  # 1024 batch elements per full-vreg block

    # Padding / grid decision: gridless single invocation for small/medium B,
    # 1-D parallel batch grid (megacore split on v7x) for large B.
    if B <= blk_elems:
        Bp = max(_LANES, ((B + _LANES - 1) // _LANES) * _LANES)
        use_grid = False
    else:
        Bp = ((B + blk_elems - 1) // blk_elems) * blk_elems
        use_grid = True
    S = Bp // _LANES

    # (B, D) -> (D, S, 128): batch index b maps to (sublane-group s=b//128, lane b%128).
    x_t = jnp.asarray(x, jnp.float32).T  # (D, B)
    if Bp != B:
        x_t = jnp.pad(x_t, ((0, 0), (0, Bp - B)))
    x_t = x_t.reshape(D, S, _LANES)

    # Single flat parameter vector in SMEM (one copy, scalar-indexed in kernel).
    p = jnp.concatenate([
        w1.reshape(-1), b1.reshape(-1),
        w2.reshape(-1), b2.reshape(-1),
        w3.reshape(-1), b3.reshape(-1),
    ]).astype(jnp.float32)

    kernel = _make_regression_kernel(D, H1, H2, O)
    smem = pl.BlockSpec(memory_space=pltpu.MemorySpace.SMEM)
    vmem = pl.BlockSpec(memory_space=pltpu.MemorySpace.VMEM)

    if not use_grid:
        out = pl.pallas_call(
            kernel,
            out_shape=jax.ShapeDtypeStruct((O, S, _LANES), jnp.float32),
            in_specs=[vmem, smem],
            out_specs=vmem,
        )(x_t, p)
    else:
        grid = (S // _SUBLANES,)
        out = pl.pallas_call(
            kernel,
            out_shape=jax.ShapeDtypeStruct((O, S, _LANES), jnp.float32),
            grid=grid,
            in_specs=[
                pl.BlockSpec((D, _SUBLANES, _LANES), lambda i: (0, i, 0)),
                smem,  # whole (tiny) parameter vector every step
            ],
            out_specs=pl.BlockSpec((O, _SUBLANES, _LANES), lambda i: (0, i, 0)),
            compiler_params=pltpu.CompilerParams(
                dimension_semantics=("parallel",)),
        )(x_t, p)

    out_flat = out.reshape(O, Bp)[:, :B]  # (O, B), padded lanes dropped
    if O == 1:
        return out_flat.reshape(B, 1)
    return out_flat.T


def init_params(key, input_size=4):
    """Synthetic init mimicking nn.Linear shapes.

    PyTorch stores weight as (out, in); we keep (in, out) so x @ W matches
    x @ weight.T exactly. Biases kept as (1, out).
    """
    k1, k2, k3, k4, k5, k6 = jax.random.split(key, 6)

    def uni(k, shape, fan_in):
        bound = 1.0 / jnp.sqrt(jnp.float32(fan_in))
        return jax.random.uniform(k, shape, jnp.float32, -bound, bound)

    w1 = uni(k1, (input_size, 3), input_size)   # hid1.weight.T
    b1 = uni(k2, (1, 3), input_size)            # hid1.bias
    w2 = uni(k3, (3, 3), 3)                     # hid2.weight.T
    b2 = uni(k4, (1, 3), 3)                     # hid2.bias
    w3 = uni(k5, (3, 1), 3)                     # outp.weight.T
    b3 = uni(k6, (1, 1), 3)                     # outp.bias
    return (w1, b1, w2, b2, w3, b3)


def reference_forward(x, params):
    w1, b1, w2, b2, w3, b3 = params
    z = jnp.maximum(x @ w1 + b1, 0.0)
    z = jnp.maximum(z @ w2 + b2, 0.0)
    return z @ w3 + b3


if __name__ == "__main__":
    key = jax.random.PRNGKey(0)
    kx, kp = jax.random.split(key)

    # Same shape as in the source file: x = torch.rand(size=(256, 4))
    x = jax.random.uniform(kx, (256, 4), jnp.float32)
    params = init_params(kp, input_size=4)

    out = jax.block_until_ready(regression_net_forward(x, params))
    ref = reference_forward(x, params)
    assert out.shape == (256, 1)
    assert jnp.allclose(out, ref, atol=1e-5, rtol=1e-5)

    # Non-multiple-of-128 batch (padding path, gridless).
    x_odd = jax.random.uniform(kx, (100, 4), jnp.float32)
    out_odd = jax.block_until_ready(regression_net_forward(x_odd, params))
    assert out_odd.shape == (100, 1)
    assert jnp.allclose(out_odd, reference_forward(x_odd, params), atol=1e-5, rtol=1e-5)

    # Large batch: exercises the 1-D parallel batch grid (TensorCore split on v7x).
    x_big = jax.random.uniform(kx, (2048, 4), jnp.float32)
    out_big = jax.block_until_ready(regression_net_forward(x_big, params))
    assert out_big.shape == (2048, 1)
    assert jnp.allclose(out_big, reference_forward(x_big, params), atol=1e-5, rtol=1e-5)

    print("KERNEL_OK")
</pallas_src>

<mosaic_0001>
module attributes {stable_mosaic.version = 11 : i64} {
  func.func @kernel(%arg0: memref<4x2x128xf32, #tpu.memory_space<vmem>>, %arg1: memref<31xf32, #tpu.memory_space<smem>>, %arg2: memref<1x2x128xf32, #tpu.memory_space<vmem>>) attributes {dimension_semantics = [], scalar_prefetch = 0 : i64, scratch_operands = 0 : i64, tpu.core_type = #tpu.core_type<tc>} {
    %c0 = arith.constant 0 : index
    %0 = memref.load %arg1[%c0] : memref<31xf32, #tpu.memory_space<smem>>
    %c0_0 = arith.constant 0 : index
    %c0_1 = arith.constant 0 : index
    %c0_2 = arith.constant 0 : index
    %1 = vector.load %arg0[%c0_0, %c0_1, %c0_2] : memref<4x2x128xf32, #tpu.memory_space<vmem>>, vector<1x2x128xf32>
    %2 = vector.shape_cast %1 : vector<1x2x128xf32> to vector<2x128xf32>
    %3 = vector.broadcast %0 : f32 to vector<2x128xf32>
    %4 = arith.mulf %3, %2 : vector<2x128xf32>
    %c12 = arith.constant 12 : index
    %5 = memref.load %arg1[%c12] : memref<31xf32, #tpu.memory_space<smem>>
    %6 = vector.broadcast %5 : f32 to vector<2x128xf32>
    %7 = arith.addf %4, %6 : vector<2x128xf32>
    %c3 = arith.constant 3 : index
    %8 = memref.load %arg1[%c3] : memref<31xf32, #tpu.memory_space<smem>>
    %c1 = arith.constant 1 : index
    %c0_3 = arith.constant 0 : index
    %c0_4 = arith.constant 0 : index
    %9 = vector.load %arg0[%c1, %c0_3, %c0_4] : memref<4x2x128xf32, #tpu.memory_space<vmem>>, vector<1x2x128xf32>
    %10 = vector.shape_cast %9 : vector<1x2x128xf32> to vector<2x128xf32>
    %11 = vector.broadcast %8 : f32 to vector<2x128xf32>
    %12 = arith.mulf %11, %10 : vector<2x128xf32>
    %13 = arith.addf %7, %12 : vector<2x128xf32>
    %c6 = arith.constant 6 : index
    %14 = memref.load %arg1[%c6] : memref<31xf32, #tpu.memory_space<smem>>
    %c2 = arith.constant 2 : index
    %c0_5 = arith.constant 0 : index
    %c0_6 = arith.constant 0 : index
    %15 = vector.load %arg0[%c2, %c0_5, %c0_6] : memref<4x2x128xf32, #tpu.memory_space<vmem>>, vector<1x2x128xf32>
    %16 = vector.shape_cast %15 : vector<1x2x128xf32> to vector<2x128xf32>
    %17 = vector.broadcast %14 : f32 to vector<2x128xf32>
    %18 = arith.mulf %17, %16 : vector<2x128xf32>
    %19 = arith.addf %13, %18 : vector<2x128xf32>
    %c9 = arith.constant 9 : index
    %20 = memref.load %arg1[%c9] : memref<31xf32, #tpu.memory_space<smem>>
    %c3_7 = arith.constant 3 : index
    %c0_8 = arith.constant 0 : index
    %c0_9 = arith.constant 0 : index
    %21 = vector.load %arg0[%c3_7, %c0_8, %c0_9] : memref<4x2x128xf32, #tpu.memory_space<vmem>>, vector<1x2x128xf32>
    %22 = vector.shape_cast %21 : vector<1x2x128xf32> to vector<2x128xf32>
    %23 = vector.broadcast %20 : f32 to vector<2x128xf32>
    %24 = arith.mulf %23, %22 : vector<2x128xf32>
    %25 = arith.addf %19, %24 : vector<2x128xf32>
    %cst = arith.constant 0.000000e+00 : f32
    %26 = vector.broadcast %cst : f32 to vector<2x128xf32>
    %27 = arith.maximumf %25, %26 : vector<2x128xf32>
    %c1_10 = arith.constant 1 : index
    %28 = memref.load %arg1[%c1_10] : memref<31xf32, #tpu.memory_space<smem>>
    %c0_11 = arith.constant 0 : index
    %c0_12 = arith.constant 0 : index
    %c0_13 = arith.constant 0 : index
    %29 = vector.load %arg0[%c0_11, %c0_12, %c0_13] : memref<4x2x128xf32, #tpu.memory_space<vmem>>, vector<1x2x128xf32>
    %30 = vector.shape_cast %29 : vector<1x2x128xf32> to vector<2x128xf32>
    %31 = vector.broadcast %28 : f32 to vector<2x128xf32>
    %32 = arith.mulf %31, %30 : vector<2x128xf32>
    %c13 = arith.constant 13 : index
    %33 = memref.load %arg1[%c13] : memref<31xf32, #tpu.memory_space<smem>>
    %34 = vector.broadcast %33 : f32 to vector<2x128xf32>
    %35 = arith.addf %32, %34 : vector<2x128xf32>
    %c4 = arith.constant 4 : index
    %36 = memref.load %arg1[%c4] : memref<31xf32, #tpu.memory_space<smem>>
    %c1_14 = arith.constant 1 : index
    %c0_15 = arith.constant 0 : index
    %c0_16 = arith.constant 0 : index
    %37 = vector.load %arg0[%c1_14, %c0_15, %c0_16] : memref<4x2x128xf32, #tpu.memory_space<vmem>>, vector<1x2x128xf32>
    %38 = vector.shape_cast %37 : vector<1x2x128xf32> to vector<2x128xf32>
    %39 = vector.broadcast %36 : f32 to vector<2x128xf32>
    %40 = arith.mulf %39, %38 : vector<2x128xf32>
    %41 = arith.addf %35, %40 : vector<2x128xf32>
    %c7 = arith.constant 7 : index
    %42 = memref.load %arg1[%c7] : memref<31xf32, #tpu.memory_space<smem>>
    %c2_17 = arith.constant 2 : index
    %c0_18 = arith.constant 0 : index
    %c0_19 = arith.constant 0 : index
    %43 = vector.load %arg0[%c2_17, %c0_18, %c0_19] : memref<4x2x128xf32, #tpu.memory_space<vmem>>, vector<1x2x128xf32>
    %44 = vector.shape_cast %43 : vector<1x2x128xf32> to vector<2x128xf32>
    %45 = vector.broadcast %42 : f32 to vector<2x128xf32>
    %46 = arith.mulf %45, %44 : vector<2x128xf32>
    %47 = arith.addf %41, %46 : vector<2x128xf32>
    %c10 = arith.constant 10 : index
    %48 = memref.load %arg1[%c10] : memref<31xf32, #tpu.memory_space<smem>>
    %c3_20 = arith.constant 3 : index
    %c0_21 = arith.constant 0 : index
    %c0_22 = arith.constant 0 : index
    %49 = vector.load %arg0[%c3_20, %c0_21, %c0_22] : memref<4x2x128xf32, #tpu.memory_space<vmem>>, vector<1x2x128xf32>
    %50 = vector.shape_cast %49 : vector<1x2x128xf32> to vector<2x128xf32>
    %51 = vector.broadcast %48 : f32 to vector<2x128xf32>
    %52 = arith.mulf %51, %50 : vector<2x128xf32>
    %53 = arith.addf %47, %52 : vector<2x128xf32>
    %cst_23 = arith.constant 0.000000e+00 : f32
    %54 = vector.broadcast %cst_23 : f32 to vector<2x128xf32>
    %55 = arith.maximumf %53, %54 : vector<2x128xf32>
    %c2_24 = arith.constant 2 : index
    %56 = memref.load %arg1[%c2_24] : memref<31xf32, #tpu.memory_space<smem>>
    %c0_25 = arith.constant 0 : index
    %c0_26 = arith.constant 0 : index
    %c0_27 = arith.constant 0 : index
    %57 = vector.load %arg0[%c0_25, %c0_26, %c0_27] : memref<4x2x128xf32, #tpu.memory_space<vmem>>, vector<1x2x128xf32>
    %58 = vector.shape_cast %57 : vector<1x2x128xf32> to vector<2x128xf32>
    %59 = vector.broadcast %56 : f32 to vector<2x128xf32>
    %60 = arith.mulf %59, %58 : vector<2x128xf32>
    %c14 = arith.constant 14 : index
    %61 = memref.load %arg1[%c14] : memref<31xf32, #tpu.memory_space<smem>>
    %62 = vector.broadcast %61 : f32 to vector<2x128xf32>
    %63 = arith.addf %60, %62 : vector<2x128xf32>
    %c5 = arith.constant 5 : index
    %64 = memref.load %arg1[%c5] : memref<31xf32, #tpu.memory_space<smem>>
    %c1_28 = arith.constant 1 : index
    %c0_29 = arith.constant 0 : index
    %c0_30 = arith.constant 0 : index
    %65 = vector.load %arg0[%c1_28, %c0_29, %c0_30] : memref<4x2x128xf32, #tpu.memory_space<vmem>>, vector<1x2x128xf32>
    %66 = vector.shape_cast %65 : vector<1x2x128xf32> to vector<2x128xf32>
    %67 = vector.broadcast %64 : f32 to vector<2x128xf32>
    %68 = arith.mulf %67, %66 : vector<2x128xf32>
    %69 = arith.addf %63, %68 : vector<2x128xf32>
    %c8 = arith.constant 8 : index
    %70 = memref.load %arg1[%c8] : memref<31xf32, #tpu.memory_space<smem>>
    %c2_31 = arith.constant 2 : index
    %c0_32 = arith.constant 0 : index
    %c0_33 = arith.constant 0 : index
    %71 = vector.load %arg0[%c2_31, %c0_32, %c0_33] : memref<4x2x128xf32, #tpu.memory_space<vmem>>, vector<1x2x128xf32>
    %72 = vector.shape_cast %71 : vector<1x2x128xf32> to vector<2x128xf32>
    %73 = vector.broadcast %70 : f32 to vector<2x128xf32>
    %74 = arith.mulf %73, %72 : vector<2x128xf32>
    %75 = arith.addf %69, %74 : vector<2x128xf32>
    %c11 = arith.constant 11 : index
    %76 = memref.load %arg1[%c11] : memref<31xf32, #tpu.memory_space<smem>>
    %c3_34 = arith.constant 3 : index
    %c0_35 = arith.constant 0 : index
    %c0_36 = arith.constant 0 : index
    %77 = vector.load %arg0[%c3_34, %c0_35, %c0_36] : memref<4x2x128xf32, #tpu.memory_space<vmem>>, vector<1x2x128xf32>
    %78 = vector.shape_cast %77 : vector<1x2x128xf32> to vector<2x128xf32>
    %79 = vector.broadcast %76 : f32 to vector<2x128xf32>
    %80 = arith.mulf %79, %78 : vector<2x128xf32>
    %81 = arith.addf %75, %80 : vector<2x128xf32>
    %cst_37 = arith.constant 0.000000e+00 : f32
    %82 = vector.broadcast %cst_37 : f32 to vector<2x128xf32>
    %83 = arith.maximumf %81, %82 : vector<2x128xf32>
    %c15 = arith.constant 15 : index
    %84 = memref.load %arg1[%c15] : memref<31xf32, #tpu.memory_space<smem>>
    %85 = vector.broadcast %84 : f32 to vector<2x128xf32>
    %86 = arith.mulf %85, %27 : vector<2x128xf32>
    %c24 = arith.constant 24 : index
    %87 = memref.load %arg1[%c24] : memref<31xf32, #tpu.memory_space<smem>>
    %88 = vector.broadcast %87 : f32 to vector<2x128xf32>
    %89 = arith.addf %86, %88 : vector<2x128xf32>
    %c18 = arith.constant 18 : index
    %90 = memref.load %arg1[%c18] : memref<31xf32, #tpu.memory_space<smem>>
    %91 = vector.broadcast %90 : f32 to vector<2x128xf32>
    %92 = arith.mulf %91, %55 : vector<2x128xf32>
    %93 = arith.addf %89, %92 : vector<2x128xf32>
    %c21 = arith.constant 21 : index
    %94 = memref.load %arg1[%c21] : memref<31xf32, #tpu.memory_space<smem>>
    %95 = vector.broadcast %94 : f32 to vector<2x128xf32>
    %96 = arith.mulf %95, %83 : vector<2x128xf32>
    %97 = arith.addf %93, %96 : vector<2x128xf32>
    %cst_38 = arith.constant 0.000000e+00 : f32
    %98 = vector.broadcast %cst_38 : f32 to vector<2x128xf32>
    %99 = arith.maximumf %97, %98 : vector<2x128xf32>
    %c16 = arith.constant 16 : index
    %100 = memref.load %arg1[%c16] : memref<31xf32, #tpu.memory_space<smem>>
    %101 = vector.broadcast %100 : f32 to vector<2x128xf32>
    %102 = arith.mulf %101, %27 : vector<2x128xf32>
    %c25 = arith.constant 25 : index
    %103 = memref.load %arg1[%c25] : memref<31xf32, #tpu.memory_space<smem>>
    %104 = vector.broadcast %103 : f32 to vector<2x128xf32>
    %105 = arith.addf %102, %104 : vector<2x128xf32>
    %c19 = arith.constant 19 : index
    %106 = memref.load %arg1[%c19] : memref<31xf32, #tpu.memory_space<smem>>
    %107 = vector.broadcast %106 : f32 to vector<2x128xf32>
    %108 = arith.mulf %107, %55 : vector<2x128xf32>
    %109 = arith.addf %105, %108 : vector<2x128xf32>
    %c22 = arith.constant 22 : index
    %110 = memref.load %arg1[%c22] : memref<31xf32, #tpu.memory_space<smem>>
    %111 = vector.broadcast %110 : f32 to vector<2x128xf32>
    %112 = arith.mulf %111, %83 : vector<2x128xf32>
    %113 = arith.addf %109, %112 : vector<2x128xf32>
    %cst_39 = arith.constant 0.000000e+00 : f32
    %114 = vector.broadcast %cst_39 : f32 to vector<2x128xf32>
    %115 = arith.maximumf %113, %114 : vector<2x128xf32>
    %c17 = arith.constant 17 : index
    %116 = memref.load %arg1[%c17] : memref<31xf32, #tpu.memory_space<smem>>
    %117 = vector.broadcast %116 : f32 to vector<2x128xf32>
    %118 = arith.mulf %117, %27 : vector<2x128xf32>
    %c26 = arith.constant 26 : index
    %119 = memref.load %arg1[%c26] : memref<31xf32, #tpu.memory_space<smem>>
    %120 = vector.broadcast %119 : f32 to vector<2x128xf32>
    %121 = arith.addf %118, %120 : vector<2x128xf32>
    %c20 = arith.constant 20 : index
    %122 = memref.load %arg1[%c20] : memref<31xf32, #tpu.memory_space<smem>>
    %123 = vector.broadcast %122 : f32 to vector<2x128xf32>
    %124 = arith.mulf %123, %55 : vector<2x128xf32>
    %125 = arith.addf %121, %124 : vector<2x128xf32>
    %c23 = arith.constant 23 : index
    %126 = memref.load %arg1[%c23] : memref<31xf32, #tpu.memory_space<smem>>
    %127 = vector.broadcast %126 : f32 to vector<2x128xf32>
    %128 = arith.mulf %127, %83 : vector<2x128xf32>
    %129 = arith.addf %125, %128 : vector<2x128xf32>
    %cst_40 = arith.constant 0.000000e+00 : f32
    %130 = vector.broadcast %cst_40 : f32 to vector<2x128xf32>
    %131 = arith.maximumf %129, %130 : vector<2x128xf32>
    %c27 = arith.constant 27 : index
    %132 = memref.load %arg1[%c27] : memref<31xf32, #tpu.memory_space<smem>>
    %133 = vector.broadcast %132 : f32 to vector<2x128xf32>
    %134 = arith.mulf %133, %99 : vector<2x128xf32>
    %c30 = arith.constant 30 : index
    %135 = memref.load %arg1[%c30] : memref<31xf32, #tpu.memory_space<smem>>
    %136 = vector.broadcast %135 : f32 to vector<2x128xf32>
    %137 = arith.addf %134, %136 : vector<2x128xf32>
    %c28 = arith.constant 28 : index
    %138 = memref.load %arg1[%c28] : memref<31xf32, #tpu.memory_space<smem>>
    %139 = vector.broadcast %138 : f32 to vector<2x128xf32>
    %140 = arith.mulf %139, %115 : vector<2x128xf32>
    %141 = arith.addf %137, %140 : vector<2x128xf32>
    %c29 = arith.constant 29 : index
    %142 = memref.load %arg1[%c29] : memref<31xf32, #tpu.memory_space<smem>>
    %143 = vector.broadcast %142 : f32 to vector<2x128xf32>
    %144 = arith.mulf %143, %131 : vector<2x128xf32>
    %145 = arith.addf %141, %144 : vector<2x128xf32>
    %c0_41 = arith.constant 0 : index
    %c0_42 = arith.constant 0 : index
    %c0_43 = arith.constant 0 : index
    %146 = vector.load %arg2[%c0_41, %c0_42, %c0_43] : memref<1x2x128xf32, #tpu.memory_space<vmem>>, vector<1x2x128xf32>
    %147 = vector.shape_cast %146 : vector<1x2x128xf32> to vector<2x128xf32>
    %148 = vector.shape_cast %145 : vector<2x128xf32> to vector<1x2x128xf32>
    tpu.vector_store %arg2[%c0_41, %c0_42, %c0_43], %148 {strides = array<i32>} : memref<1x2x128xf32, #tpu.memory_space<vmem>>, vector<1x2x128xf32>,
    return
  }
}

</mosaic_0001>

<llo_original>
// kernel: tpu_custom_call.1
$region0: #{tpu_custom_call.1}
  #allocation0 [shape = 'u32[]', space=smem, size = 0x4, offset = 0x4, fixed_abs, tag = 'smem constant byte address 0x4 - core index']
  #allocation1 [shape = 'u32[144,128]{1,0:T(1,128)}', space=vmem, size = 0x12000, scoped, tag = 'internal scratch']
  %s0 = inlined_call_operand.hbm [shape: f32[4,2,128], index: 0, kind: input, shape index: {}]
  %s1 = inlined_call_operand.vmem [shape: f32[31], index: 1, kind: input, shape index: {}]
  %s2 = inlined_call_operand.hbm [shape: f32[1,2,128], index: 2, kind: output, shape index: {}]
  %s3 = sld [smem:[#allocation0]]
  $region26: #{tpu_custom_call.1} parent=0
    _
  %s5 = ssub.s32 1, %s3
  %s6 = scalar_select 0, %s5, %s3
  $region1: #{tpu_custom_call.1} parent=0
    #allocation2 [shape = 'u8[4096]{0}', space=vmem, size = 0x1000, scoped, tag = 'input window, operand 0, single buffered']
    #allocation3 [shape = 's32[1]{0}', space=sflag, size = 0x4, scoped, tag = 'scoped memory for tpu_custom_call.1']
    #allocation4 [shape = 's32[1]{0}', space=sflag, size = 0x4, scoped, tag = 'scoped memory for tpu_custom_call.1']
    #allocation5 [shape = 's32[1]{0}', space=sflag, size = 0x4, scoped, tag = 'scoped memory for tpu_custom_call.1']
    #allocation6 [shape = 'u8[512]{0}', space=smem, size = 0x200, scoped, tag = 'input window, operand 1, single buffered']
    #allocation7 [shape = 'u8[1024]{0}', space=vmem, size = 0x400, scoped, tag = 'output window, operand 0, single buffered']
    %7 = vsyncpa [#allocation3], 0
    %8 = vsyncpa [#allocation5], 0
    %9 = vsyncpa [#allocation4], 0
    // Predicated region
    $region2: #{tpu_custom_call.1} parent=1 // pred_check
      _
    $region3: #{tpu_custom_call.1} parent=1 // pred_check_branch
      %11 = sbr.rel (0) target = $region5
    $region4: #{tpu_custom_call.1} parent=1 // pred_region
      %s13 = ssub.s32 128, 128
      %14 = vsyncadd [#allocation3], %s13
      %s15 = sshll.u32 [#allocation2], 4
      %s16 = int_to_ptr.vmem [resolvable:$true] %s15
      %21 = dma.hbm_to_vmem [thread:$0]  %s0, 128, %s16, [#allocation3], 32, 32, 2
    $region5: #{tpu_custom_call.1} parent=1 // pred_fallthru
      _
    // Predicated region
    $region6: #{tpu_custom_call.1} parent=1 // pred_check
      _
    $region7: #{tpu_custom_call.1} parent=1 // pred_check_branch
      %23 = sbr.rel (0) target = $region9
    $region8: #{tpu_custom_call.1} parent=1 // pred_region
      %s25 = ssub.s32 16, 16
      %26 = vsyncadd [#allocation5], %s25
      %s28 = sshll.u32 %s1, 4
      %s29 = int_to_ptr.vmem [resolvable:$true] %s28
      %31 = dma.vmem_to_smem %s29, 16, [#allocation6], [#allocation5]
    $region9: #{tpu_custom_call.1} parent=1 // pred_fallthru
      _
    // Predicated region
    $region10: #{tpu_custom_call.1} parent=1 // pred_check
      _
    $region11: #{tpu_custom_call.1} parent=1 // pred_check_branch
      %33 = sbr.rel (0) target = $region13
    $region12: #{tpu_custom_call.1} parent=1 // pred_region
      %34 = dma.done [#allocation3], 128
    $region13: #{tpu_custom_call.1} parent=1 // pred_fallthru
      _
    // Predicated region
    $region14: #{tpu_custom_call.1} parent=1 // pred_check
      _
    $region15: #{tpu_custom_call.1} parent=1 // pred_check_branch
      %36 = sbr.rel (0) target = $region17
    $region16: #{tpu_custom_call.1} parent=1 // pred_region
      %37 = dma.done [#allocation5], 16
    $region17: #{tpu_custom_call.1} parent=1 // pred_fallthru
      _
    %38 = sfence
    %s39 = sld [smem:[#allocation6]]
    %v40 = vld [vmem:[#allocation2] sm:$0x3]
    %v41 = vstv %s39
    %v42 = vmul.f32 %v41, %v40
    %s43 = sld [smem:[#allocation6 + $0xc]]
    %v44 = vstv %s43
    %v45 = vadd.f32 %v42, %v44
    %s46 = sld [smem:[#allocation6 + $0x3]]
    %s47 = scalar_lea.vmem [#allocation2], 2
    %v48 = vld [vmem:[%s47] sm:$0x3]
    %v49 = vstv %s46
    %v50 = vmul.f32 %v49, %v48
    %v51 = vadd.f32 %v45, %v50
    %s52 = sld [smem:[#allocation6 + $0x6]]
    %s53 = scalar_lea.vmem [#allocation2], 4
    %v54 = vld [vmem:[%s53] sm:$0x3]
    %v55 = vstv %s52
    %v56 = vmul.f32 %v55, %v54
    %v57 = vadd.f32 %v51, %v56
    %s58 = sld [smem:[#allocation6 + $0x9]]
    %s59 = scalar_lea.vmem [#allocation2], 6
    %v60 = vld [vmem:[%s59] sm:$0x3]
    %v61 = vstv %s58
    %v62 = vmul.f32 %v61, %v60
    %v63 = vadd.f32 %v57, %v62
    %v64 = vmax.f32 %v63, 0.0
    %s65 = sld [smem:[#allocation6 + $0x1]]
    %v66 = vstv %s65
    %v67 = vmul.f32 %v66, %v40
    %s68 = sld [smem:[#allocation6 + $0xd]]
    %v69 = vstv %s68
    %v70 = vadd.f32 %v67, %v69
    %s71 = sld [smem:[#allocation6 + $0x4]]
    %v72 = vstv %s71
    %v73 = vmul.f32 %v72, %v48
    %v74 = vadd.f32 %v70, %v73
    %s75 = sld [smem:[#allocation6 + $0x7]]
    %v76 = vstv %s75
    %v77 = vmul.f32 %v76, %v54
    %v78 = vadd.f32 %v74, %v77
    %s79 = sld [smem:[#allocation6 + $0xa]]
    %v80 = vstv %s79
    %v81 = vmul.f32 %v80, %v60
    %v82 = vadd.f32 %v78, %v81
    %v83 = vmax.f32 %v82, 0.0
    %s84 = sld [smem:[#allocation6 + $0x2]]
    %v85 = vstv %s84
    %v86 = vmul.f32 %v85, %v40
    %s87 = sld [smem:[#allocation6 + $0xe]]
    %v88 = vstv %s87
    %v89 = vadd.f32 %v86, %v88
    %s90 = sld [smem:[#allocation6 + $0x5]]
    %v91 = vstv %s90
    %v92 = vmul.f32 %v91, %v48
    %v93 = vadd.f32 %v89, %v92
    %s94 = sld [smem:[#allocation6 + $0x8]]
    %v95 = vstv %s94
    %v96 = vmul.f32 %v95, %v54
    %v97 = vadd.f32 %v93, %v96
    %s98 = sld [smem:[#allocation6 + $0xb]]
    %v99 = vstv %s98
    %v100 = vmul.f32 %v99, %v60
    %v101 = vadd.f32 %v97, %v100
    %v102 = vmax.f32 %v101, 0.0
    %s103 = sld [smem:[#allocation6 + $0xf]]
    %v104 = vstv %s103
    %v105 = vmul.f32 %v104, %v64
    %s106 = sld [smem:[#allocation6 + $0x18]]
    %v107 = vstv %s106
    %v108 = vadd.f32 %v105, %v107
    %s109 = sld [smem:[#allocation6 + $0x12]]
    %v110 = vstv %s109
    %v111 = vmul.f32 %v110, %v83
    %v112 = vadd.f32 %v108, %v111
    %s113 = sld [smem:[#allocation6 + $0x15]]
    %v114 = vstv %s113
    %v115 = vmul.f32 %v114, %v102
    %v116 = vadd.f32 %v112, %v115
    %v117 = vmax.f32 %v116, 0.0
    %s118 = sld [smem:[#allocation6 + $0x10]]
    %v119 = vstv %s118
    %v120 = vmul.f32 %v119, %v64
    %s121 = sld [smem:[#allocation6 + $0x19]]
    %v122 = vstv %s121
    %v123 = vadd.f32 %v120, %v122
    %s124 = sld [smem:[#allocation6 + $0x13]]
    %v125 = vstv %s124
    %v126 = vmul.f32 %v125, %v83
    %v127 = vadd.f32 %v123, %v126
    %s128 = sld [smem:[#allocation6 + $0x16]]
    %v129 = vstv %s128
    %v130 = vmul.f32 %v129, %v102
    %v131 = vadd.f32 %v127, %v130
    %v132 = vmax.f32 %v131, 0.0
    %s133 = sld [smem:[#allocation6 + $0x11]]
    %v134 = vstv %s133
    %v135 = vmul.f32 %v134, %v64
    %s136 = sld [smem:[#allocation6 + $0x1a]]
    %v137 = vstv %s136
    %v138 = vadd.f32 %v135, %v137
    %s139 = sld [smem:[#allocation6 + $0x14]]
    %v140 = vstv %s139
    %v141 = vmul.f32 %v140, %v83
    %v142 = vadd.f32 %v138, %v141
    %s143 = sld [smem:[#allocation6 + $0x17]]
    %v144 = vstv %s143
    %v145 = vmul.f32 %v144, %v102
    %v146 = vadd.f32 %v142, %v145
    %v147 = vmax.f32 %v146, 0.0
    %s148 = sld [smem:[#allocation6 + $0x1b]]
    %v149 = vstv %s148
    %v150 = vmul.f32 %v149, %v117
    %s151 = sld [smem:[#allocation6 + $0x1e]]
    %v152 = vstv %s151
    %v153 = vadd.f32 %v150, %v152
    %s154 = sld [smem:[#allocation6 + $0x1c]]
    %v155 = vstv %s154
    %v156 = vmul.f32 %v155, %v132
    %v157 = vadd.f32 %v153, %v156
    %s158 = sld [smem:[#allocation6 + $0x1d]]
    %v159 = vstv %s158
    %v160 = vmul.f32 %v159, %v147
    %v161 = vadd.f32 %v157, %v160
    %162 = vst [vmem:[#allocation7] sm:$0x3] %v161
    // Predicated region
    $region18: #{tpu_custom_call.1} parent=1 // pred_check
      _
    $region19: #{tpu_custom_call.1} parent=1 // pred_check_branch
      %164 = sbr.rel (0) target = $region21
    $region20: #{tpu_custom_call.1} parent=1 // pred_region
      %s166 = ssub.s32 32, 32
      %167 = vsyncadd [#allocation4], %s166
      %s169 = sshll.u32 [#allocation7], 4
      %s170 = int_to_ptr.vmem [resolvable:$true] %s169
      %172 = dma.vmem_to_hbm [thread:$0]  %s170, 32, %s2, [#allocation4]
    $region21: #{tpu_custom_call.1} parent=1 // pred_fallthru
      _
    // Predicated region
    $region22: #{tpu_custom_call.1} parent=1 // pred_check
      _
    $region23: #{tpu_custom_call.1} parent=1 // pred_check_branch
      %174 = sbr.rel (0) target = $region25
    $region24: #{tpu_custom_call.1} parent=1 // pred_region
      %175 = dma.done [#allocation4], 32
    $region25: #{tpu_custom_call.1} parent=1 // pred_fallthru
      _
    %176 = vsyncpa [#allocation3], 1
    %177 = vsyncpa [#allocation4], 1
    %178 = vsyncpa [#allocation5], 1

</llo_original>
